<compile_context>
chip_gen: v7x
topology: tpu7x:2x2x1
jax: 0.10.0
libtpu: 0.0.40
codegen_flags: <defaults>
</compile_context>

<pallas_src>
import functools

import jax
import jax.numpy as jnp
from jax import lax
from jax.experimental import pallas as pl
from jax.experimental.pallas import tpu as pltpu

BN_EPS = 1e-5
DROP_P = 0.85
KEEP_PROB = 1.0 - DROP_P
KEEP_THRESH_23 = int(KEEP_PROB * (1 << 23))   # keep iff (hash & 0x7FFFFF) < this


def _dropout_keep(flat_idx, seed):
    """Deterministic keep-mask from an int32 hash of the global NHWC element index.

    Pure integer VPU ops -> lowers under Mosaic and in interpret mode alike.
    `(x >> 16) & 0xFFFF` is exactly a logical right shift for int32.
    # TODO(synk): cannot bit-match torch.nn.Dropout's RNG stream (same keep prob).
    """
    h = flat_idx + seed * jnp.int32(0x9E3779B)
    h = (((h >> 16) & 0xFFFF) ^ h) * jnp.int32(0x45D9F3B)
    h = (((h >> 16) & 0xFFFF) ^ h) * jnp.int32(0x45D9F3B)
    h = ((h >> 16) & 0xFFFF) ^ h
    return (h & jnp.int32(0x7FFFFF)) < jnp.int32(KEEP_THRESH_23)


def _elu(x):
    return jnp.where(x > 0, x, jnp.exp(jnp.minimum(x, 0.0)) - 1.0)


# ---------------------------------------------------------------------------
# Pass 1: BN batch statistics on the lane-dense (N*H, W*C) view.
# Resident (1, W*C) accumulators across an "arbitrary" row-tile grid axis;
# rows beyond N*H (non-divisible tail) are masked to zero.
# ---------------------------------------------------------------------------
def bn_stats_kernel(x_ref, sum_ref, sq_ref, *, nh):
    i = pl.program_id(0)

    @pl.when(i == 0)
    def _init():
        sum_ref[...] = jnp.zeros_like(sum_ref)
        sq_ref[...] = jnp.zeros_like(sq_ref)

    x = x_ref[...].astype(jnp.float32)                 # (tile_rows, W*C)
    tr = x.shape[0]
    row = i * tr + lax.broadcasted_iota(jnp.int32, x.shape, 0)
    x = jnp.where(row < nh, x, 0.0)                    # mask OOB tail rows
    sum_ref[...] += jnp.sum(x, axis=0, keepdims=True)
    sq_ref[...] += jnp.sum(x * x, axis=0, keepdims=True)
    # TODO(synk): E[x^2]-E[x]^2 can cancel for badly-centred inputs; use a
    # shifted / two-pass moment formulation if that matters.


# ---------------------------------------------------------------------------
# Pass 2: fused BN + ELU + dilated 3x3 conv + bias + dropout + residual.
# Grid = (image, H-tile).  The kw taps and the W zero boundary live in the
# block-banded weights, so the conv is 3 row-shifted matmuls; the +/- d row
# halo comes from two small adjacent-row-block inputs (BN+ELU recomputed,
# zeroed at the image top/bottom every step).
# ---------------------------------------------------------------------------
def fused_block_kernel(seed_ref, x_ref, prev_ref, next_ref, scale_ref,
                       shift_ref, wb_ref, b_ref, out_ref, pad_ref,
                       *, d, H, TH, HB, WC):
    n = pl.program_id(0)
    t = pl.program_id(1)
    nt = pl.num_programs(1)

    scale = scale_ref[...]                             # (1, W*C)
    shift = shift_ref[...]

    # BatchNorm (batch stats folded into scale/shift) + ELU on the centre tile.
    x = x_ref[...].astype(jnp.float32)                 # (TH, W*C)
    bn = x * scale + shift
    act = _elu(bn)

    # Halo rows above/below, recomputed BN+ELU; zeroed at image borders every
    # step (matches conv zero padding, and keeps per-core scratch correct when
    # the "parallel" grid axes are sharded across TensorCores).
    top = _elu(prev_ref[...].astype(jnp.float32) * scale + shift)   # (HB, W*C)
    bot = _elu(next_ref[...].astype(jnp.float32) * scale + shift)   # (HB, W*C)
    top = top * (t > 0).astype(jnp.float32)
    bot = bot * (t < nt - 1).astype(jnp.float32)

    # Row-padded activation scratch; every store is 8-row aligned and the whole
    # buffer is rewritten each step (no stale data, only 2*HB extra halo rows).
    pad_ref[0:HB, :] = top
    pad_ref[HB:HB + TH, :] = act
    pad_ref[HB + TH:HB + TH + HB, :] = bot

    # Dilated 3x3 conv: three (TH, W*C) x (W*C, W*C) MXU matmuls; only the kh
    # (row) shifts remain — plain sublane-offset slices of the padded scratch.
    conv = b_ref[...] + jnp.dot(pad_ref[HB - d:HB - d + TH, :], wb_ref[0],
                                preferred_element_type=jnp.float32)
    conv = conv + jnp.dot(act, wb_ref[1], preferred_element_type=jnp.float32)
    conv = conv + jnp.dot(pad_ref[HB + d:HB + d + TH, :], wb_ref[2],
                          preferred_element_type=jnp.float32)
    # weights & bias already carry the 1/keep_prob dropout scale.

    # Dropout keep mask: hash of the global NHWC flat index (scalar base + iota).
    base = (n * H + t * TH) * WC
    r = lax.broadcasted_iota(jnp.int32, (TH, WC), 0)
    l = lax.broadcasted_iota(jnp.int32, (TH, WC), 1)
    keep = _dropout_keep(base + r * WC + l, seed_ref[0])

    out_ref[...] = (bn + jnp.where(keep, conv, 0.0)).astype(out_ref.dtype)


# ---------------------------------------------------------------------------
# Wrapper helpers
# ---------------------------------------------------------------------------
def _stats_tile_rows(nh, wc, target_bytes=2 * 1024 * 1024):
    """Row tile for pass 1: ~target_bytes per block, multiple of 8, <= padded N*H."""
    nh_pad = -(-nh // 8) * 8
    by_bytes = (target_bytes // (wc * 4)) // 8 * 8
    return int(max(8, min(nh_pad, by_bytes)))


def _conv_tile_rows(h, hb):
    """H tile for pass 2: multiple of hb dividing H, a few hundred rows max,
    preferring >=2 tiles per image so the pipeline has depth."""
    cands = [t for t in range(hb, h + 1, hb) if h % t == 0]
    cap = max(hb, 256)
    small = [t for t in cands if t <= cap] or [min(cands)]
    pref = [t for t in small if h // t >= 2]
    return max(pref) if pref else max(small)


def block_forward(x_nchw, conv_weight_oihw, conv_bias, bn_gamma, bn_beta,
                  *, dilation, seed=0):
    N, C, H, W = x_nchw.shape
    d = int(dilation)
    WC = W * C
    NH = N * H
    NHW = N * H * W

    # Lane-dense view: row = n*H + h, column = w*C + c.
    # TODO(synk): this transpose (and the one on the way out) is an extra HBM
    # round trip forced by the NCHW call boundary.
    x_rows = jnp.transpose(x_nchw, (0, 2, 3, 1)).reshape(NH, WC)

    # ---- pass 1: per-channel batch statistics (tiled, masked reduction) ----
    tr = _stats_tile_rows(NH, WC)
    lane_sum, lane_sq = pl.pallas_call(
        functools.partial(bn_stats_kernel, nh=NH),
        grid=(pl.cdiv(NH, tr),),
        in_specs=[pl.BlockSpec((tr, WC), lambda i: (i, 0))],
        out_specs=(pl.BlockSpec((1, WC), lambda i: (0, 0)),
                   pl.BlockSpec((1, WC), lambda i: (0, 0))),
        out_shape=(jax.ShapeDtypeStruct((1, WC), jnp.float32),
                   jax.ShapeDtypeStruct((1, WC), jnp.float32)),
        compiler_params=pltpu.CompilerParams(dimension_semantics=("arbitrary",)),
    )(x_rows)

    ch_sum = lane_sum.reshape(W, C).sum(axis=0)
    ch_sq = lane_sq.reshape(W, C).sum(axis=0)
    mean = ch_sum / NHW
    var = ch_sq / NHW - mean * mean                    # biased batch variance
    inv_std = lax.rsqrt(var + BN_EPS)
    gamma = bn_gamma.astype(jnp.float32)
    beta = bn_beta.astype(jnp.float32)
    scale_c = gamma * inv_std
    shift_c = beta - mean * scale_c
    scale_wc = jnp.tile(scale_c, W).reshape(1, WC)     # broadcast over w
    shift_wc = jnp.tile(shift_c, W).reshape(1, WC)
    # TODO(synk): BatchNorm running_mean/var update (training side effect) is not emitted.

    # Block-banded conv weights (3, W*C, W*C): kw shifts + W zero boundary baked
    # in, dropout 1/keep scale folded in.  wband[kh][w_in*C+cin, w_out*C+cout]
    # = weight[cout, cin, kh, kw] iff w_in == w_out + (kw-1)*d.
    w_f = conv_weight_oihw.astype(jnp.float32) / KEEP_PROB          # (Co, Ci, 3, 3)
    wband = jnp.stack([
        sum(jnp.kron(jnp.eye(W, k=-(kw - 1) * d, dtype=jnp.float32),
                     w_f[:, :, kh, kw].T)
            for kw in range(3))
        for kh in range(3)], axis=0)                                 # (3, WC, WC)
    # TODO(synk): the banded weight is O((W*C)^2); for very wide images tile W
    # (or fall back to per-pixel CxC dots) instead.
    b_wc = jnp.tile(conv_bias.astype(jnp.float32) / KEEP_PROB, W).reshape(1, WC)

    # ---- pass 2 tiling: H tiles + halo row-blocks ----
    HB = -(-d // 8) * 8                                # halo block rows (>= d, mult of 8)
    assert H % HB == 0, (
        "TODO(synk): pad/tail-mask rows for H not a multiple of the halo block")
    TH = _conv_tile_rows(H, HB)
    nt = H // TH
    hbi = H // HB
    thb = TH // HB
    last_hb = N * hbi - 1

    def center_map(n, t, s):
        return (n * nt + t, 0)

    def prev_map(n, t, s):                             # row-block just above the tile
        return (jnp.maximum(n * hbi + t * thb - 1, 0), 0)

    def next_map(n, t, s):                             # row-block just below the tile
        return (jnp.minimum(n * hbi + (t + 1) * thb, last_hb), 0)

    def const2(n, t, s):
        return (0, 0)

    def const3(n, t, s):
        return (0, 0, 0)

    seed_arr = jnp.asarray([seed], dtype=jnp.int32)
    kern = functools.partial(fused_block_kernel, d=d, H=H, TH=TH, HB=HB, WC=WC)

    out_rows = pl.pallas_call(
        kern,
        grid_spec=pltpu.PrefetchScalarGridSpec(
            num_scalar_prefetch=1,
            grid=(N, nt),
            in_specs=[
                pl.BlockSpec((TH, WC), center_map),
                pl.BlockSpec((HB, WC), prev_map),
                pl.BlockSpec((HB, WC), next_map),
                pl.BlockSpec((1, WC), const2),         # BN scale
                pl.BlockSpec((1, WC), const2),         # BN shift
                pl.BlockSpec((3, WC, WC), const3),     # banded conv weights
                pl.BlockSpec((1, WC), const2),         # conv bias
            ],
            out_specs=pl.BlockSpec((TH, WC), center_map),
            scratch_shapes=[pltpu.VMEM((2 * HB + TH, WC), jnp.float32)]),
        out_shape=jax.ShapeDtypeStruct((NH, WC), x_nchw.dtype),
        compiler_params=pltpu.CompilerParams(
            dimension_semantics=("parallel", "parallel")),   # shard over v7x's 2 TCs
    )(seed_arr, x_rows, x_rows, x_rows, scale_wc, shift_wc, wband, b_wc)

    return jnp.transpose(out_rows.reshape(N, H, W, C), (0, 3, 1, 2))


# ---------------------------------------------------------------------------
if __name__ == "__main__":
    key = jax.random.PRNGKey(0)
    k_x, k_w, k_b, k_g, k_be = jax.random.split(key, 5)

    N, C, H, W = 2, 8, 16, 16
    dilation = 2
    seed = 42

    x = jax.random.normal(k_x, (N, C, H, W), jnp.float32)
    conv_weight = 0.1 * jax.random.normal(k_w, (C, C, 3, 3), jnp.float32)
    conv_bias = 0.1 * jax.random.normal(k_b, (C,), jnp.float32)
    bn_gamma = 1.0 + 0.1 * jax.random.normal(k_g, (C,), jnp.float32)
    bn_beta = 0.1 * jax.random.normal(k_be, (C,), jnp.float32)

    out = block_forward(x, conv_weight, conv_bias, bn_gamma, bn_beta,
                        dilation=dilation, seed=seed)
    out = jax.block_until_ready(out)
    assert out.shape == (N, C, H, W), out.shape
    assert bool(jnp.all(jnp.isfinite(out)))

    # Pure-JAX reference using the SAME deterministic dropout mask.
    xr = jnp.transpose(x, (0, 2, 3, 1)).astype(jnp.float32)
    mu = xr.mean(axis=(0, 1, 2))
    va = xr.var(axis=(0, 1, 2))
    bn_ref = (xr - mu) * lax.rsqrt(va + BN_EPS) * bn_gamma + bn_beta
    act_ref = jnp.where(bn_ref > 0, bn_ref, jnp.exp(bn_ref) - 1.0)
    conv_ref = lax.conv_general_dilated(
        act_ref, jnp.transpose(conv_weight, (2, 3, 1, 0)),
        window_strides=(1, 1), padding=[(dilation, dilation)] * 2,
        rhs_dilation=(dilation, dilation),
        dimension_numbers=("NHWC", "HWIO", "NHWC")) + conv_bias
    idx = jnp.arange(N * H * W * C, dtype=jnp.int32).reshape(N, H, W, C)
    keep = _dropout_keep(idx, jnp.int32(seed))
    expected = bn_ref + jnp.where(keep, conv_ref / KEEP_PROB, 0.0)
    got = jnp.transpose(out, (0, 2, 3, 1))
    assert bool(jnp.allclose(got, expected, rtol=5e-3, atol=5e-3)), \
        float(jnp.max(jnp.abs(got - expected)))
    frac = float(jnp.mean(keep.astype(jnp.float32)))
    assert 0.05 < frac < 0.30, frac

    print("KERNEL_OK")
</pallas_src>

<mosaic_0001>
module attributes {stable_mosaic.version = 11 : i64} {
  func.func @bn_stats_kernel(%arg0: i32, %arg1: memref<32x128xf32, #tpu.memory_space<vmem>>, %arg2: memref<1x128xf32, #tpu.memory_space<vmem>>, %arg3: memref<1x128xf32, #tpu.memory_space<vmem>>) attributes {dimension_semantics = [#tpu.dimension_semantics<arbitrary>], iteration_bounds = array<i64: 1>, scalar_prefetch = 0 : i64, scratch_operands = 0 : i64, tpu.core_type = #tpu.core_type<tc>, window_params = [{transform_indices = @transform_0, window_bounds = array<i64: 32, 128>}, {pipeline_mode = #tpu.pipeline_mode<synchronous>, transform_indices = @transform_1, window_bounds = array<i64: 1, 128>}, {pipeline_mode = #tpu.pipeline_mode<synchronous>, transform_indices = @transform_2, window_bounds = array<i64: 1, 128>}]} {
    %c0_i32 = arith.constant 0 : i32
    %0 = arith.cmpi eq, %arg0, %c0_i32 : i32
    %1 = arith.extui %0 : i1 to i32
    %c0_i32_0 = arith.constant 0 : i32
    %2 = arith.cmpi ne, %1, %c0_i32_0 : i32
    scf.if %2 {
      %cst_13 = arith.constant 0.000000e+00 : f32
      %23 = vector.broadcast %cst_13 : f32 to vector<1x128xf32>
      %c0_14 = arith.constant 0 : index
      %c0_15 = arith.constant 0 : index
      %24 = vector.load %arg2[%c0_14, %c0_15] : memref<1x128xf32, #tpu.memory_space<vmem>>, vector<1x128xf32>
      tpu.vector_store %arg2[%c0_14, %c0_15], %23 {strides = array<i32>} : memref<1x128xf32, #tpu.memory_space<vmem>>, vector<1x128xf32>,
      %cst_16 = arith.constant 0.000000e+00 : f32
      %25 = vector.broadcast %cst_16 : f32 to vector<1x128xf32>
      %c0_17 = arith.constant 0 : index
      %c0_18 = arith.constant 0 : index
      %26 = vector.load %arg3[%c0_17, %c0_18] : memref<1x128xf32, #tpu.memory_space<vmem>>, vector<1x128xf32>
      tpu.vector_store %arg3[%c0_17, %c0_18], %25 {strides = array<i32>} : memref<1x128xf32, #tpu.memory_space<vmem>>, vector<1x128xf32>,
    } else {
    }
    %c0 = arith.constant 0 : index
    %c0_1 = arith.constant 0 : index
    %3 = vector.load %arg1[%c0, %c0_1] : memref<32x128xf32, #tpu.memory_space<vmem>>, vector<32x128xf32>
    %c32_i32 = arith.constant 32 : i32
    %4 = arith.muli %arg0, %c32_i32 : i32
    %5 = tpu.iota {dimensions = array<i32: 0>} : vector<32x128xi32>
    %6 = vector.broadcast %4 : i32 to vector<32x128xi32>
    %7 = arith.addi %6, %5 : vector<32x128xi32>
    %c32_i32_2 = arith.constant 32 : i32
    %8 = vector.broadcast %c32_i32_2 : i32 to vector<32x128xi32>
    %9 = arith.cmpi slt, %7, %8 : vector<32x128xi32>
    %cst = arith.constant 0.000000e+00 : f32
    %10 = vector.broadcast %cst : f32 to vector<32x128xf32>
    %11 = arith.select %9, %3, %10 : vector<32x128xi1>, vector<32x128xf32>
    %c0_3 = arith.constant 0 : index
    %c0_4 = arith.constant 0 : index
    %12 = vector.load %arg2[%c0_3, %c0_4] : memref<1x128xf32, #tpu.memory_space<vmem>>, vector<1x128xf32>
    %cst_5 = arith.constant dense<0.000000e+00> : vector<128xf32>
    %13 = vector.multi_reduction <add>, %11, %cst_5 [0] : vector<32x128xf32> to vector<128xf32>
    %14 = vector.shape_cast %13 : vector<128xf32> to vector<1x128xf32>
    %15 = arith.addf %12, %14 : vector<1x128xf32>
    %c0_6 = arith.constant 0 : index
    %c0_7 = arith.constant 0 : index
    %16 = vector.load %arg2[%c0_6, %c0_7] : memref<1x128xf32, #tpu.memory_space<vmem>>, vector<1x128xf32>
    tpu.vector_store %arg2[%c0_6, %c0_7], %15 {strides = array<i32>} : memref<1x128xf32, #tpu.memory_space<vmem>>, vector<1x128xf32>,
    %c0_8 = arith.constant 0 : index
    %c0_9 = arith.constant 0 : index
    %17 = vector.load %arg3[%c0_8, %c0_9] : memref<1x128xf32, #tpu.memory_space<vmem>>, vector<1x128xf32>
    %18 = arith.mulf %11, %11 : vector<32x128xf32>
    %cst_10 = arith.constant dense<0.000000e+00> : vector<128xf32>
    %19 = vector.multi_reduction <add>, %18, %cst_10 [0] : vector<32x128xf32> to vector<128xf32>
    %20 = vector.shape_cast %19 : vector<128xf32> to vector<1x128xf32>
    %21 = arith.addf %17, %20 : vector<1x128xf32>
    %c0_11 = arith.constant 0 : index
    %c0_12 = arith.constant 0 : index
    %22 = vector.load %arg3[%c0_11, %c0_12] : memref<1x128xf32, #tpu.memory_space<vmem>>, vector<1x128xf32>
    tpu.vector_store %arg3[%c0_11, %c0_12], %21 {strides = array<i32>} : memref<1x128xf32, #tpu.memory_space<vmem>>, vector<1x128xf32>,
    return
  }
  func.func @transform_0(%arg0: i32) -> (i32, i32) {
    %c0_i32 = arith.constant 0 : i32
    %c0_i32_0 = arith.constant 0 : i32
    return %arg0, %c0_i32 : i32, i32
  }
  func.func @transform_1(%arg0: i32) -> (i32, i32) {
    %c0_i32 = arith.constant 0 : i32
    %c0_i32_0 = arith.constant 0 : i32
    %c0_i32_1 = arith.constant 0 : i32
    return %c0_i32, %c0_i32_0 : i32, i32
  }
  func.func @transform_2(%arg0: i32) -> (i32, i32) {
    %c0_i32 = arith.constant 0 : i32
    %c0_i32_0 = arith.constant 0 : i32
    %c0_i32_1 = arith.constant 0 : i32
    return %c0_i32, %c0_i32_0 : i32, i32
  }
}

</mosaic_0001>

<llo_original>
// kernel: tpu_custom_call.1
$region0: #{tpu_custom_call.1}
  #allocation0 [shape = 'u32[]', space=smem, size = 0x4, offset = 0x4, fixed_abs, tag = 'smem constant byte address 0x4 - core index']
  #allocation1 [shape = 'u32[144,128]{1,0:T(1,128)}', space=vmem, size = 0x12000, scoped, tag = 'internal scratch']
  %s0 = inlined_call_operand.hbm [shape: f32[32,128], index: 0, kind: input, shape index: {}]
  %s1 = inlined_call_operand.hbm [shape: f32[1,128], index: 1, kind: output, shape index: {0}]
  %s2 = inlined_call_operand.hbm [shape: f32[1,128], index: 2, kind: output, shape index: {1}]
  %3 = xla_tuple %s1, %s2
  %s4 = sld [smem:[#allocation0]]
  $region30: #{tpu_custom_call.1} parent=0
    _
  %s6 = ssub.s32 1, %s4
  %s7 = scalar_select 0, %s6, %s4
  $region1: #{tpu_custom_call.1} parent=0
    #allocation2 [shape = 'u8[16384]{0}', space=vmem, size = 0x4000, scoped, tag = 'input window, operand 0, single buffered']
    #allocation3 [shape = 's32[1]{0}', space=sflag, size = 0x4, scoped, tag = 'scoped memory for tpu_custom_call.1']
    #allocation4 [shape = 's32[1]{0}', space=sflag, size = 0x4, scoped, tag = 'scoped memory for tpu_custom_call.1']
    #allocation5 [shape = 'u8[512]{0}', space=vmem, size = 0x400, scoped, tag = 'output window, operand 0, single buffered']
    #allocation6 [shape = 'u8[512]{0}', space=vmem, size = 0x400, scoped, tag = 'output window, operand 1, single buffered']
    #allocation7 [shape = 's32[1]{0}', space=sflag, size = 0x4, scoped, tag = 'scoped memory for tpu_custom_call.1']
    %8 = vsyncpa [#allocation3], 0
    %9 = vsyncpa [#allocation4], 0
    %10 = vsyncpa [#allocation7], 0
    // Predicated region
    $region2: #{tpu_custom_call.1} parent=1 // pred_check
      _
    $region3: #{tpu_custom_call.1} parent=1 // pred_check_branch
      %12 = sbr.rel (0) target = $region5
    $region4: #{tpu_custom_call.1} parent=1 // pred_region
      %s14 = ssub.s32 512, 512
      %15 = vsyncadd [#allocation3], %s14
      %s16 = sshll.u32 [#allocation2], 4
      %s17 = int_to_ptr.vmem [resolvable:$true] %s16
      %22 = dma.hbm_to_vmem [thread:$0]  %s0, 512, %s17, [#allocation3], 128, 128, 8
    $region5: #{tpu_custom_call.1} parent=1 // pred_fallthru
      _
    // Predicated region
    $region6: #{tpu_custom_call.1} parent=1 // pred_check
      _
    $region7: #{tpu_custom_call.1} parent=1 // pred_check_branch
      %24 = sbr.rel (0) target = $region9
    $region8: #{tpu_custom_call.1} parent=1 // pred_region
      %25 = dma.done [#allocation3], 512
    $region9: #{tpu_custom_call.1} parent=1 // pred_fallthru
      _
    %p26 = scmp.eq.s32.totalorder 0, 0
    // Predicated region
    $region10: #{tpu_custom_call.1} parent=1 // pred_check
      %p27 = pneg %p26
    $region11: #{tpu_custom_call.1} parent=1 // pred_check_branch
      %29 = sbr.rel (%p27) target = $region13
    $region12: #{tpu_custom_call.1} parent=1 // pred_region
      %30 = vst [vmem:[#allocation5] sm:$0x1] 0.0
      %31 = vst [vmem:[#allocation6] sm:$0x1] 0.0
    $region13: #{tpu_custom_call.1} parent=1 // pred_fallthru
      _
    %v32 = vld [vmem:[#allocation2] sm:$0xff]
    %v33 = vld [vmem:[#allocation2 + $0x8] sm:$0xff]
    %v34 = vld [vmem:[#allocation2 + $0x10] sm:$0xff]
    %v35 = vld [vmem:[#allocation2 + $0x18] sm:$0xff]
    %s36 = smul.u32 0, 32
    %v37 = vlaneseq
    %v38 = vshrl.u32 %v37, 7
    %v39 = vadd.s32 %v38, 8
    %v40 = vadd.s32 %v38, 16
    %v41 = vadd.s32 %v38, 24
    %v42 = vstv %s36
    %v43 = vadd.s32 %v42, %v38
    %v44 = vadd.s32 %v42, %v39
    %v45 = vadd.s32 %v42, %v40
    %v46 = vadd.s32 %v42, %v41
    %vm47 = vcmp.lt.s32.totalorder %v43, 32
    %vm48 = vcmp.lt.s32.totalorder %v44, 32
    %vm49 = vcmp.lt.s32.totalorder %v45, 32
    %vm50 = vcmp.lt.s32.totalorder %v46, 32
    %v51 = vsel %vm47, %v32, 0.0
    %v52 = vsel %vm48, %v33, 0.0
    %v53 = vsel %vm49, %v34, 0.0
    %v54 = vsel %vm50, %v35, 0.0
    %v55 = vld [vmem:[#allocation5] sm:$0x1]
    %v56 = vadd.f32 %v51, %v52
    %v57 = vadd.f32 %v56, %v53
    %v58 = vadd.f32 %v57, %v54
    %v59 = vrot.slane %v58, 4
    %v60 = vadd.f32 %v58, %v59
    %v61 = vrot.slane %v60, 2
    %v62 = vadd.f32 %v60, %v61
    %v63 = vrot.slane %v62, 1
    %v64 = vadd.f32 %v62, %v63
    %v65 = vadd.f32 %v55, %v64
    %66 = vst [vmem:[#allocation5] sm:$0x1] %v65
    %v67 = vld [vmem:[#allocation6] sm:$0x1]
    %v68 = vmul.f32 %v51, %v51
    %v69 = vmul.f32 %v52, %v52
    %v70 = vmul.f32 %v53, %v53
    %v71 = vmul.f32 %v54, %v54
    %v72 = vadd.f32 %v68, %v69
    %v73 = vadd.f32 %v72, %v70
    %v74 = vadd.f32 %v73, %v71
    %v75 = vrot.slane %v74, 4
    %v76 = vadd.f32 %v74, %v75
    %v77 = vrot.slane %v76, 2
    %v78 = vadd.f32 %v76, %v77
    %v79 = vrot.slane %v78, 1
    %v80 = vadd.f32 %v78, %v79
    %v81 = vadd.f32 %v67, %v80
    %82 = vst [vmem:[#allocation6] sm:$0x1] %v81
    // Predicated region
    $region14: #{tpu_custom_call.1} parent=1 // pred_check
      _
    $region15: #{tpu_custom_call.1} parent=1 // pred_check_branch
      %84 = sbr.rel (0) target = $region17
    $region16: #{tpu_custom_call.1} parent=1 // pred_region
      %s86 = ssub.s32 16, 16
      %87 = vsyncadd [#allocation4], %s86
      %s89 = sshll.u32 [#allocation5], 4
      %s90 = int_to_ptr.vmem [resolvable:$true] %s89
      %92 = dma.vmem_to_hbm [thread:$0]  %s90, 16, %s1, [#allocation4]
    $region17: #{tpu_custom_call.1} parent=1 // pred_fallthru
      _
    // Predicated region
    $region18: #{tpu_custom_call.1} parent=1 // pred_check
      _
    $region19: #{tpu_custom_call.1} parent=1 // pred_check_branch
      %94 = sbr.rel (0) target = $region21
    $region20: #{tpu_custom_call.1} parent=1 // pred_region
      %s96 = ssub.s32 16, 16
      %97 = vsyncadd [#allocation7], %s96
      %s99 = sshll.u32 [#allocation6], 4
      %s100 = int_to_ptr.vmem [resolvable:$true] %s99
      %102 = dma.vmem_to_hbm [thread:$0]  %s100, 16, %s2, [#allocation7]
    $region21: #{tpu_custom_call.1} parent=1 // pred_fallthru
      _
    // Predicated region
    $region22: #{tpu_custom_call.1} parent=1 // pred_check
      _
    $region23: #{tpu_custom_call.1} parent=1 // pred_check_branch
      %104 = sbr.rel (0) target = $region25
    $region24: #{tpu_custom_call.1} parent=1 // pred_region
      %105 = dma.done [#allocation4], 16
    $region25: #{tpu_custom_call.1} parent=1 // pred_fallthru
      _
    // Predicated region
    $region26: #{tpu_custom_call.1} parent=1 // pred_check
      _
    $region27: #{tpu_custom_call.1} parent=1 // pred_check_branch
      %107 = sbr.rel (0) target = $region29
    $region28: #{tpu_custom_call.1} parent=1 // pred_region
      %108 = dma.done [#allocation7], 16
    $region29: #{tpu_custom_call.1} parent=1 // pred_fallthru
      _
    %109 = vsyncpa [#allocation3], 1
    %110 = vsyncpa [#allocation4], 1
    %111 = vsyncpa [#allocation7], 1

</llo_original>
